<compile_context>
chip_gen: v6e
topology: v6e:2x2x1
jax: 0.10.0
libtpu: 0.0.40
codegen_flags: <defaults>
</compile_context>

<pallas_src>
import functools
import math

import jax
import jax.numpy as jnp
from jax.experimental import pallas as pl
from jax.experimental.pallas import tpu as pltpu

_MIB = 1024 * 1024
_VMEM_BUDGET = 40 * _MIB      # leave headroom under v7x's 64 MiB physical VMEM
_MIN_GRID_STEPS = 4           # let the batch axis shard across v7x's 2 cores
_SUB = 16                     # sublane quantum (covers both bf16 and f32 tiles)


def _cdiv(a, b):
    return -(-a // b)


def _round_up(a, m):
    return _cdiv(a, m) * m


def _side_mlp_kernel(x_ref, w1_ref, c1_ref, w2_ref, c2_ref, o_ref):
    # In-kernel cast: x streams from HBM in its native dtype (no wrapper-side
    # convert pass); the MXU accumulates in f32 either way.
    x = x_ref[...].astype(w1_ref.dtype)                         # (TR, p*d_in)

    # Layer 0: Linear (bias + eval-BN folded into W1'/c1) -> ReLU (dropout=id)
    h = jnp.dot(x, w1_ref[...], preferred_element_type=jnp.float32)
    h = jnp.maximum(h + c1_ref[...], 0.0)                       # f32 epilogue

    # Layer 1 (last): Linear (bias + eval-BN folded)             (dropout=id)
    o = jnp.dot(h.astype(w2_ref.dtype), w2_ref[...],
                preferred_element_type=jnp.float32)
    o_ref[...] = (o + c2_ref[...]).astype(o_ref.dtype)


def _auto_pack(d_in, h_dim, d_out, lane_target=128, dilution_cap=1024):
    """How many batch rows to fold into the lane axis (block-diag kron)."""
    if min(d_in, h_dim, d_out) >= lane_target:
        return 1
    p = lane_target // math.gcd(lane_target, d_out)   # lane-dense output slab
    # kron(I_p, W) makes the MXU do p x redundant zero-FLOPs; keep the dilution
    # small so v5e (197 TF/s MXU) stays memory-bound, not compute-bound.
    while p > 1 and p * max(d_in, h_dim, d_out) > dilution_cap:
        p //= 2
    return max(p, 1)


def _vmem_bytes(block_rows, p, d_in, h_dim, d_out, x_bytes, w_bytes, o_bytes):
    x_tile = 2 * block_rows * p * d_in * x_bytes            # double-buffered in
    o_tile = 2 * block_rows * p * d_out * o_bytes           # double-buffered out
    weights = 2 * (p * d_in * p * h_dim + p * h_dim * p * d_out) * w_bytes
    biases = 2 * (p * h_dim + p * d_out) * 4
    h_tmp = block_rows * p * h_dim * 4                      # f32 intermediate
    return x_tile + o_tile + weights + biases + h_tmp


@functools.partial(jax.jit,
                   static_argnames=("block_n", "use_bf16", "pack", "out_dtype"))
def side_mlp_forward(x, w1, b1, s1, t1, w2, b2, s2, t2, *,
                     block_n=512, use_bf16=True, pack=None,
                     out_dtype=jnp.float32):
    """Fused eval-mode SideMLP forward.

    x : (N, d_in).  w1: (h, d_in), w2: (d_out, h) in torch layout.
    s*/t* are the eval-mode BatchNorm scale/shift per feature.
    """
    n, d_in = x.shape
    h_dim = w1.shape[0]
    d_out = w2.shape[0]

    # ---- host-side constant folding: bias + eval-BN affine into the weights --
    w1f = w1.T * s1[None, :]                          # (d_in, h)
    c1 = (b1 * s1 + t1).reshape(1, h_dim)             # f32 shift
    w2f = w2.T * s2[None, :]                          # (h, d_out)
    c2 = (b2 * s2 + t2).reshape(1, d_out)

    p = _auto_pack(d_in, h_dim, d_out) if pack is None else pack
    cdtype = jnp.bfloat16 if use_bf16 else jnp.float32

    # ---- lane-dense packing: p batch rows per lane-axis slab (layout only) ---
    if p > 1:
        eye = jnp.eye(p, dtype=w1f.dtype)
        w1f = jnp.kron(eye, w1f)                      # (p*d_in, p*h) block-diag
        w2f = jnp.kron(eye, w2f)                      # (p*h, p*d_out)
        c1 = jnp.tile(c1, (1, p))
        c2 = jnp.tile(c2, (1, p))
    w1f = w1f.astype(cdtype)
    w2f = w2f.astype(cdtype)

    # ---- minimal padding: only to a multiple of p (<= p-1 rows). The ragged
    # last grid tile is handled by Pallas with masked partial stores. ---------
    rows = _cdiv(n, p)
    n_pad = rows * p
    if n_pad != n:
        x = jnp.pad(x, ((0, n_pad - n), (0, 0)))
    xp = x.reshape(rows, p * d_in)                    # contiguous, no dtype cast

    # ---- batch tiling ---------------------------------------------------------
    block_rows = _round_up(max(block_n, 1), _SUB)          # sublane quantum
    block_rows = min(block_rows, _round_up(rows, _SUB))    # don't exceed batch
    if rows > _SUB:                                        # >= MIN_GRID_STEPS
        block_rows = min(block_rows,
                         max(_SUB, _round_up(_cdiv(rows, _MIN_GRID_STEPS), _SUB)))

    x_bytes = jnp.dtype(x.dtype).itemsize
    w_bytes = jnp.dtype(cdtype).itemsize
    o_bytes = jnp.dtype(out_dtype).itemsize
    while (block_rows > _SUB and
           _vmem_bytes(block_rows, p, d_in, h_dim, d_out,
                       x_bytes, w_bytes, o_bytes) > _VMEM_BUDGET):
        block_rows = _round_up(block_rows // 2, _SUB)
    est = _vmem_bytes(block_rows, p, d_in, h_dim, d_out,
                      x_bytes, w_bytes, o_bytes)
    vmem_limit = int(min(48 * _MIB, max(32 * _MIB, 2 * est)))

    grid = (pl.cdiv(rows, block_rows),)
    full = lambda i: (0, 0)

    out = pl.pallas_call(
        _side_mlp_kernel,
        out_shape=jax.ShapeDtypeStruct((rows, p * d_out), out_dtype),
        grid_spec=pltpu.PrefetchScalarGridSpec(
            num_scalar_prefetch=0,
            grid=grid,
            in_specs=[
                pl.BlockSpec((block_rows, p * d_in), lambda i: (i, 0)),  # x tile
                pl.BlockSpec((p * d_in, p * h_dim), full),               # W1'
                pl.BlockSpec((1, p * h_dim), full),                      # c1
                pl.BlockSpec((p * h_dim, p * d_out), full),              # W2'
                pl.BlockSpec((1, p * d_out), full),                      # c2
            ],
            out_specs=pl.BlockSpec((block_rows, p * d_out), lambda i: (i, 0)),
        ),
        compiler_params=pltpu.CompilerParams(
            dimension_semantics=("parallel",),
            vmem_limit_bytes=vmem_limit),
    )(xp, w1f, c1, w2f, c2)

    out = out.reshape(n_pad, d_out)                   # free (contiguous)
    return out if n_pad == n else out[:n]


# ------------------------- parameter init / references -------------------------

def _xavier_uniform(key, fan_in, fan_out):
    limit = (6.0 / (fan_in + fan_out)) ** 0.5
    return jax.random.uniform(key, (fan_out, fan_in), jnp.float32, -limit, limit)


def _linear_bias_init(key, fan_in, fan_out):
    bound = 1.0 / (fan_in ** 0.5)
    return jax.random.uniform(key, (fan_out,), jnp.float32, -bound, bound)


def make_params(key, input_dim, hid_dim, out_dim):
    k1, k2, k3, k4 = jax.random.split(key, 4)
    w1 = _xavier_uniform(k1, input_dim, hid_dim)     # (hid, in) torch layout
    b1 = _linear_bias_init(k2, input_dim, hid_dim)
    w2 = _xavier_uniform(k3, hid_dim, out_dim)       # (out, hid) torch layout
    b2 = _linear_bias_init(k4, hid_dim, out_dim)

    eps = 1e-5
    # Fresh BatchNorm1d in eval mode: running_mean=0, running_var=1, gamma=1, beta=0
    s1 = jnp.full((hid_dim,), 1.0 / jnp.sqrt(1.0 + eps), jnp.float32)
    t1 = jnp.zeros((hid_dim,), jnp.float32)
    s2 = jnp.full((out_dim,), 1.0 / jnp.sqrt(1.0 + eps), jnp.float32)
    t2 = jnp.zeros((out_dim,), jnp.float32)
    return w1, b1, s1, t1, w2, b2, s2, t2


def reference_forward(x, w1, b1, s1, t1, w2, b2, s2, t2):
    h = x @ w1.T + b1
    h = h * s1 + t1
    h = jnp.maximum(h, 0.0)
    o = h @ w2.T + b2
    o = o * s2 + t2
    return o


def reference_forward_cast(x, w1, b1, s1, t1, w2, b2, s2, t2, dtype):
    """Mirrors the kernel's bf16-compute / f32-accumulate casting exactly."""
    f32 = jnp.float32
    w1f = (w1.T * s1[None, :]).astype(dtype).astype(f32)
    c1 = b1 * s1 + t1
    w2f = (w2.T * s2[None, :]).astype(dtype).astype(f32)
    c2 = b2 * s2 + t2
    xc = x.astype(dtype).astype(f32)
    h = xc @ w1f + c1
    h = jnp.maximum(h, 0.0)
    o = h.astype(dtype).astype(f32) @ w2f + c2
    return o


if __name__ == "__main__":
    INPUT_DIM, HID_DIM, OUT_DIM = 32, 16, 16

    key = jax.random.PRNGKey(0)
    kx, kp, kx2 = jax.random.split(key, 3)
    params = make_params(kp, INPUT_DIM, HID_DIM, OUT_DIM)

    # Small p-aligned batch (single grid step).
    N = 128
    x = jax.random.normal(kx, (N, INPUT_DIM), jnp.float32)
    ref = reference_forward(x, *params)

    # f32 path: tight check of the fused / folded / lane-packed kernel.
    out_f32 = jax.block_until_ready(side_mlp_forward(x, *params, use_bf16=False))
    assert out_f32.shape == (N, OUT_DIM)
    assert jnp.allclose(out_f32, ref, atol=1e-4, rtol=1e-4)

    # bf16-compute path (default, in-kernel cast): tight vs cast-faithful ref.
    out = jax.block_until_ready(side_mlp_forward(x, *params))
    ref_cast = reference_forward_cast(x, *params, dtype=jnp.bfloat16)
    assert out.shape == (N, OUT_DIM)
    assert jnp.allclose(out, ref_cast, atol=1e-3, rtol=1e-3)
    assert jnp.allclose(out, ref, atol=5e-2, rtol=5e-2)

    # Ragged batch: pads <= p-1 rows, multiple grid steps, ragged last tile.
    N2 = 300
    x2 = jax.random.normal(kx2, (N2, INPUT_DIM), jnp.float32)
    ref2 = reference_forward(x2, *params)
    out2 = jax.block_until_ready(side_mlp_forward(x2, *params, use_bf16=False))
    assert out2.shape == (N2, OUT_DIM)
    assert jnp.allclose(out2, ref2, atol=1e-4, rtol=1e-4)

    # Optional bf16 output (halved store-side HBM traffic).
    out_bf16 = jax.block_until_ready(
        side_mlp_forward(x, *params, out_dtype=jnp.bfloat16))
    assert out_bf16.dtype == jnp.bfloat16
    assert jnp.allclose(out_bf16.astype(jnp.float32), ref, atol=8e-2, rtol=8e-2)

    print("KERNEL_OK")
</pallas_src>

<mosaic_0001>
module attributes {stable_mosaic.version = 11 : i64} {
  func.func @_side_mlp_kernel(%arg0: i32, %arg1: memref<16x256xf32, #tpu.memory_space<vmem>>, %arg2: memref<256x128xf32, #tpu.memory_space<vmem>>, %arg3: memref<1x128xf32, #tpu.memory_space<vmem>>, %arg4: memref<128x128xf32, #tpu.memory_space<vmem>>, %arg5: memref<1x128xf32, #tpu.memory_space<vmem>>, %arg6: memref<16x128xf32, #tpu.memory_space<vmem>>) attributes {dimension_semantics = [#tpu.dimension_semantics<parallel>], iteration_bounds = array<i64: 1>, scalar_prefetch = 0 : i64, scratch_operands = 0 : i64, tpu.core_type = #tpu.core_type<tc>, window_params = [{transform_indices = @transform_0, window_bounds = array<i64: 16, 256>}, {pipeline_mode = #tpu.pipeline_mode<synchronous>, transform_indices = @transform_1, window_bounds = array<i64: 256, 128>}, {pipeline_mode = #tpu.pipeline_mode<synchronous>, transform_indices = @transform_2, window_bounds = array<i64: 1, 128>}, {pipeline_mode = #tpu.pipeline_mode<synchronous>, transform_indices = @transform_3, window_bounds = array<i64: 128, 128>}, {pipeline_mode = #tpu.pipeline_mode<synchronous>, transform_indices = @transform_4, window_bounds = array<i64: 1, 128>}, {transform_indices = @transform_5, window_bounds = array<i64: 16, 128>}]} {
    %c0 = arith.constant 0 : index
    %c0_0 = arith.constant 0 : index
    %0 = vector.load %arg1[%c0, %c0_0] : memref<16x256xf32, #tpu.memory_space<vmem>>, vector<16x256xf32>
    %c0_1 = arith.constant 0 : index
    %c0_2 = arith.constant 0 : index
    %1 = vector.load %arg2[%c0_1, %c0_2] : memref<256x128xf32, #tpu.memory_space<vmem>>, vector<256x128xf32>
    %cst = arith.constant dense<0.000000e+00> : vector<16x128xf32>
    %2 = tpu.matmul %0, %1, %cst {dimension_numbers = #tpu.dot_dimension_numbers<[1], [0], [0], [1], [0, 0, 1, 1], [], []>} : vector<16x256xf32>, vector<256x128xf32>, vector<16x128xf32> -> vector<16x128xf32>
    %c0_3 = arith.constant 0 : index
    %c0_4 = arith.constant 0 : index
    %3 = vector.load %arg3[%c0_3, %c0_4] : memref<1x128xf32, #tpu.memory_space<vmem>>, vector<1x128xf32>
    %4 = vector.broadcast %3 : vector<1x128xf32> to vector<16x128xf32>
    %5 = arith.addf %2, %4 : vector<16x128xf32>
    %cst_5 = arith.constant 0.000000e+00 : f32
    %6 = vector.broadcast %cst_5 : f32 to vector<16x128xf32>
    %7 = arith.maximumf %5, %6 : vector<16x128xf32>
    %c0_6 = arith.constant 0 : index
    %c0_7 = arith.constant 0 : index
    %8 = vector.load %arg4[%c0_6, %c0_7] : memref<128x128xf32, #tpu.memory_space<vmem>>, vector<128x128xf32>
    %cst_8 = arith.constant dense<0.000000e+00> : vector<16x128xf32>
    %9 = tpu.matmul %7, %8, %cst_8 {dimension_numbers = #tpu.dot_dimension_numbers<[1], [0], [0], [1], [0, 0, 1, 1], [], []>} : vector<16x128xf32>, vector<128x128xf32>, vector<16x128xf32> -> vector<16x128xf32>
    %c0_9 = arith.constant 0 : index
    %c0_10 = arith.constant 0 : index
    %10 = vector.load %arg5[%c0_9, %c0_10] : memref<1x128xf32, #tpu.memory_space<vmem>>, vector<1x128xf32>
    %11 = vector.broadcast %10 : vector<1x128xf32> to vector<16x128xf32>
    %12 = arith.addf %9, %11 : vector<16x128xf32>
    %c0_11 = arith.constant 0 : index
    %c0_12 = arith.constant 0 : index
    %13 = vector.load %arg6[%c0_11, %c0_12] : memref<16x128xf32, #tpu.memory_space<vmem>>, vector<16x128xf32>
    tpu.vector_store %arg6[%c0_11, %c0_12], %12 {strides = array<i32>} : memref<16x128xf32, #tpu.memory_space<vmem>>, vector<16x128xf32>,
    return
  }
  func.func @transform_0(%arg0: i32) -> (i32, i32) {
    %c0_i32 = arith.constant 0 : i32
    %c0_i32_0 = arith.constant 0 : i32
    return %arg0, %c0_i32 : i32, i32
  }
  func.func @transform_1(%arg0: i32) -> (i32, i32) {
    %c0_i32 = arith.constant 0 : i32
    %c0_i32_0 = arith.constant 0 : i32
    %c0_i32_1 = arith.constant 0 : i32
    return %c0_i32, %c0_i32_0 : i32, i32
  }
  func.func @transform_2(%arg0: i32) -> (i32, i32) {
    %c0_i32 = arith.constant 0 : i32
    %c0_i32_0 = arith.constant 0 : i32
    %c0_i32_1 = arith.constant 0 : i32
    return %c0_i32, %c0_i32_0 : i32, i32
  }
  func.func @transform_3(%arg0: i32) -> (i32, i32) {
    %c0_i32 = arith.constant 0 : i32
    %c0_i32_0 = arith.constant 0 : i32
    %c0_i32_1 = arith.constant 0 : i32
    return %c0_i32, %c0_i32_0 : i32, i32
  }
  func.func @transform_4(%arg0: i32) -> (i32, i32) {
    %c0_i32 = arith.constant 0 : i32
    %c0_i32_0 = arith.constant 0 : i32
    %c0_i32_1 = arith.constant 0 : i32
    return %c0_i32, %c0_i32_0 : i32, i32
  }
  func.func @transform_5(%arg0: i32) -> (i32, i32) {
    %c0_i32 = arith.constant 0 : i32
    %c0_i32_0 = arith.constant 0 : i32
    return %arg0, %c0_i32 : i32, i32
  }
}

</mosaic_0001>

<llo_original>
// kernel: side_mlp_forward.1
$region0: #{side_mlp_forward.1}
  #allocation0 [shape = 'u32[]', space=smem, size = 0x4, offset = 0x4, fixed_abs, tag = 'smem constant byte address 0x4 - core index']
  #allocation1 [shape = 'u32[144,128]{1,0:T(1,128)}', space=vmem, size = 0x12000, scoped, tag = 'internal scratch']
  %s0 = inlined_call_operand.vmem [shape: f32[16,256], index: 0, kind: input, shape index: {}]
  %s1 = inlined_call_operand.vmem [shape: f32[256,128], index: 1, kind: input, shape index: {}]
  %s2 = inlined_call_operand.vmem [shape: f32[1,128], index: 2, kind: input, shape index: {}]
  %s3 = inlined_call_operand.vmem [shape: f32[128,128], index: 3, kind: input, shape index: {}]
  %s4 = inlined_call_operand.vmem [shape: f32[1,128], index: 4, kind: input, shape index: {}]
  %s5 = inlined_call_operand.vmem [shape: f32[16,128], index: 5, kind: output, shape index: {}]
  %s6 = sld [smem:[#allocation0]]
  $region30: #{side_mlp_forward.1} parent=0
    _
  %s8 = ssub.s32 1, %s6
  %s9 = scalar_select 0, %s8, %s6
  // Predicated region
  $region2: #{side_mlp_forward.1} parent=0 // pred_check
    _
  $region3: #{side_mlp_forward.1} parent=0 // pred_check_branch
    %11 = sbr.rel (0) target = $region5
  $region4: #{side_mlp_forward.1} parent=0 // pred_region
    _
  $region5: #{side_mlp_forward.1} parent=0 // pred_fallthru
    _
  // Predicated region
  $region6: #{side_mlp_forward.1} parent=0 // pred_check
    _
  $region7: #{side_mlp_forward.1} parent=0 // pred_check_branch
    %13 = sbr.rel (0) target = $region9
  $region8: #{side_mlp_forward.1} parent=0 // pred_region
    _
  $region9: #{side_mlp_forward.1} parent=0 // pred_fallthru
    _
  // Predicated region
  $region10: #{side_mlp_forward.1} parent=0 // pred_check
    _
  $region11: #{side_mlp_forward.1} parent=0 // pred_check_branch
    %15 = sbr.rel (0) target = $region13
  $region12: #{side_mlp_forward.1} parent=0 // pred_region
    _
  $region13: #{side_mlp_forward.1} parent=0 // pred_fallthru
    _
  // Predicated region
  $region14: #{side_mlp_forward.1} parent=0 // pred_check
    _
  $region15: #{side_mlp_forward.1} parent=0 // pred_check_branch
    %17 = sbr.rel (0) target = $region17
  $region16: #{side_mlp_forward.1} parent=0 // pred_region
    _
  $region17: #{side_mlp_forward.1} parent=0 // pred_fallthru
    _
  // Predicated region
  $region18: #{side_mlp_forward.1} parent=0 // pred_check
    _
  $region19: #{side_mlp_forward.1} parent=0 // pred_check_branch
    %19 = sbr.rel (0) target = $region21
  $region20: #{side_mlp_forward.1} parent=0 // pred_region
    _
  $region21: #{side_mlp_forward.1} parent=0 // pred_fallthru
    _
  %v20 = vld [vmem:[%s0] sm:$0xff]
  %v21 = vld [vmem:[%s0 + $0x8] sm:$0xff]
  %v22 = vld [vmem:[%s0 + $0x10] sm:$0xff]
  %v23 = vld [vmem:[%s0 + $0x18] sm:$0xff]
  %v24 = vld [vmem:[%s1] sm:$0xff]
  %v25 = vld [vmem:[%s1 + $0x8] sm:$0xff]
  %v26 = vld [vmem:[%s1 + $0x10] sm:$0xff]
  %v27 = vld [vmem:[%s1 + $0x18] sm:$0xff]
  %v28 = vld [vmem:[%s1 + $0x20] sm:$0xff]
  %v29 = vld [vmem:[%s1 + $0x28] sm:$0xff]
  %v30 = vld [vmem:[%s1 + $0x30] sm:$0xff]
  %v31 = vld [vmem:[%s1 + $0x38] sm:$0xff]
  %v32 = vld [vmem:[%s1 + $0x40] sm:$0xff]
  %v33 = vld [vmem:[%s1 + $0x48] sm:$0xff]
  %v34 = vld [vmem:[%s1 + $0x50] sm:$0xff]
  %v35 = vld [vmem:[%s1 + $0x58] sm:$0xff]
  %v36 = vld [vmem:[%s1 + $0x60] sm:$0xff]
  %v37 = vld [vmem:[%s1 + $0x68] sm:$0xff]
  %v38 = vld [vmem:[%s1 + $0x70] sm:$0xff]
  %v39 = vld [vmem:[%s1 + $0x78] sm:$0xff]
  %v40 = vld [vmem:[%s1 + $0x80] sm:$0xff]
  %v41 = vld [vmem:[%s1 + $0x88] sm:$0xff]
  %v42 = vld [vmem:[%s1 + $0x90] sm:$0xff]
  %v43 = vld [vmem:[%s1 + $0x98] sm:$0xff]
  %v44 = vld [vmem:[%s1 + $0xa0] sm:$0xff]
  %v45 = vld [vmem:[%s1 + $0xa8] sm:$0xff]
  %v46 = vld [vmem:[%s1 + $0xb0] sm:$0xff]
  %v47 = vld [vmem:[%s1 + $0xb8] sm:$0xff]
  %v48 = vld [vmem:[%s1 + $0xc0] sm:$0xff]
  %v49 = vld [vmem:[%s1 + $0xc8] sm:$0xff]
  %v50 = vld [vmem:[%s1 + $0xd0] sm:$0xff]
  %v51 = vld [vmem:[%s1 + $0xd8] sm:$0xff]
  %v52 = vld [vmem:[%s1 + $0xe0] sm:$0xff]
  %v53 = vld [vmem:[%s1 + $0xe8] sm:$0xff]
  %v54 = vld [vmem:[%s1 + $0xf0] sm:$0xff]
  %v55 = vld [vmem:[%s1 + $0xf8] sm:$0xff]
  %v56 = vld [vmem:[%s2] sm:$0x1]
  %v58 = vlaneseq
  %v59 = vshrl.u32 %v58, 7
  %v60 = vsub.s32 0, %v59
  %v61 = vrot.slane %v56, %v60
  %63 = vmatprep.subr.mxu0 0.0
  %64 = vmatpush1.msra.mxu0 %v39
  %65 = vmatprep.subr.mxu0 0.0
  %66 = vmatpush1.msra.mxu0 %v38
  %67 = vmatprep.subr.mxu0 0.0
  %68 = vmatpush1.msra.mxu0 %v37
  %69 = vmatprep.subr.mxu0 0.0
  %70 = vmatpush1.msra.mxu0 %v36
  %71 = vmatprep.subr.mxu0 0.0
  %72 = vmatpush1.msra.mxu0 %v35
  %73 = vmatprep.subr.mxu0 0.0
  %74 = vmatpush1.msra.mxu0 %v34
  %75 = vmatprep.subr.mxu0 0.0
  %76 = vmatpush1.msra.mxu0 %v33
  %77 = vmatprep.subr.mxu0 0.0
  %78 = vmatpush1.msra.mxu0 %v32
  %79 = vmatprep.subr.mxu0 0.0
  %80 = vmatpush1.msra.mxu0 %v31
  %81 = vmatprep.subr.mxu0 0.0
  %82 = vmatpush1.msra.mxu0 %v30
  %83 = vmatprep.subr.mxu0 0.0
  %84 = vmatpush1.msra.mxu0 %v29
  %85 = vmatprep.subr.mxu0 0.0
  %86 = vmatpush1.msra.mxu0 %v28
  %87 = vmatprep.subr.mxu0 0.0
  %88 = vmatpush1.msra.mxu0 %v27
  %89 = vmatprep.subr.mxu0 0.0
  %90 = vmatpush1.msra.mxu0 %v26
  %91 = vmatprep.subr.mxu0 0.0
  %92 = vmatpush1.msra.mxu0 %v25
  %93 = vmatprep.subr.mxu0 0.0
  %94 = vmatpush1.msra.mxu0 %v24
  %95 = vmatprep.subr.mxu0 0.0
  %96 = vmatpush2.msra.mxu0 %v55
  %97 = vmatprep.subr.mxu0 0.0
  %98 = vmatpush2.msra.mxu0 %v54
  %99 = vmatprep.subr.mxu0 0.0
  %100 = vmatpush2.msra.mxu0 %v53
  %101 = vmatprep.subr.mxu0 0.0
  %102 = vmatpush2.msra.mxu0 %v52
  %103 = vmatprep.subr.mxu0 0.0
  %104 = vmatpush2.msra.mxu0 %v51
  %105 = vmatprep.subr.mxu0 0.0
  %106 = vmatpush2.msra.mxu0 %v50
  %107 = vmatprep.subr.mxu0 0.0
  %108 = vmatpush2.msra.mxu0 %v49
  %109 = vmatprep.subr.mxu0 0.0
  %110 = vmatpush2.msra.mxu0 %v48
  %111 = vmatprep.subr.mxu0 0.0
  %112 = vmatpush2.msra.mxu0 %v47
  %113 = vmatprep.subr.mxu0 0.0
  %114 = vmatpush2.msra.mxu0 %v46
  %115 = vmatprep.subr.mxu0 0.0
  %116 = vmatpush2.msra.mxu0 %v45
  %117 = vmatprep.subr.mxu0 0.0
  %118 = vmatpush2.msra.mxu0 %v44
  %119 = vmatprep.subr.mxu0 0.0
  %120 = vmatpush2.msra.mxu0 %v43
  %121 = vmatprep.subr.mxu0 0.0
  %122 = vmatpush2.msra.mxu0 %v42
  %123 = vmatprep.subr.mxu0 0.0
  %124 = vmatpush2.msra.mxu0 %v41
  %125 = vmatprep.subr.mxu0 0.0
  %126 = vmatpush2.msra.mxu0 %v40
  %127 = vmatprep.mubr.f32.mxu0 %v21
  %128 = vmatmul.mubr.f32.gmra.mxu0 %v20
  %v129 = vpop.f32.mrf.mxu0
  %v130 = vadd.f32 %v61, %v129
  %v131 = vpop.f32.mrf.mxu0
  %132 = vmatprep.mubr.f32.mxu0 %v23
  %133 = vmatmul.mubr.f32.gmra.mxu0 %v22
  %v134 = vpop.f32.mrf.mxu0
  %v135 = vadd.f32 %v61, %v134
  %v136 = vpop.f32.mrf.mxu0
  %137 = vdwg.mxu0
  %v138 = vmax.f32 %v130, 0.0
  %v139 = vmax.f32 %v135, 0.0
  %v140 = vld [vmem:[%s3] sm:$0xff]
  %v141 = vld [vmem:[%s3 + $0x8] sm:$0xff]
  %v142 = vld [vmem:[%s3 + $0x10] sm:$0xff]
  %v143 = vld [vmem:[%s3 + $0x18] sm:$0xff]
  %v144 = vld [vmem:[%s3 + $0x20] sm:$0xff]
  %v145 = vld [vmem:[%s3 + $0x28] sm:$0xff]
  %v146 = vld [vmem:[%s3 + $0x30] sm:$0xff]
  %v147 = vld [vmem:[%s3 + $0x38] sm:$0xff]
  %v148 = vld [vmem:[%s3 + $0x40] sm:$0xff]
  %v149 = vld [vmem:[%s3 + $0x48] sm:$0xff]
  %v150 = vld [vmem:[%s3 + $0x50] sm:$0xff]
  %v151 = vld [vmem:[%s3 + $0x58] sm:$0xff]
  %v152 = vld [vmem:[%s3 + $0x60] sm:$0xff]
  %v153 = vld [vmem:[%s3 + $0x68] sm:$0xff]
  %v154 = vld [vmem:[%s3 + $0x70] sm:$0xff]
  %v155 = vld [vmem:[%s3 + $0x78] sm:$0xff]
  %v156 = vld [vmem:[%s4] sm:$0x1]
  %v158 = vlaneseq
  %v159 = vshrl.u32 %v158, 7
  %v160 = vsub.s32 0, %v159
  %v161 = vrot.slane %v156, %v160
  %163 = vmatprep.subr.mxu0 0.0
  %164 = vmatpush1.msra.mxu0 %v155
  %165 = vmatprep.subr.mxu0 0.0
  %166 = vmatpush1.msra.mxu0 %v154
  %167 = vmatprep.subr.mxu0 0.0
  %168 = vmatpush1.msra.mxu0 %v153
  %169 = vmatprep.subr.mxu0 0.0
  %170 = vmatpush1.msra.mxu0 %v152
  %171 = vmatprep.subr.mxu0 0.0
  %172 = vmatpush1.msra.mxu0 %v151
  %173 = vmatprep.subr.mxu0 0.0
  %174 = vmatpush1.msra.mxu0 %v150
  %175 = vmatprep.subr.mxu0 0.0
  %176 = vmatpush1.msra.mxu0 %v149
  %177 = vmatprep.subr.mxu0 0.0
  %178 = vmatpush1.msra.mxu0 %v148
  %179 = vmatprep.subr.mxu0 0.0
  %180 = vmatpush1.msra.mxu0 %v147
  %181 = vmatprep.subr.mxu0 0.0
  %182 = vmatpush1.msra.mxu0 %v146
  %183 = vmatprep.subr.mxu0 0.0
  %184 = vmatpush1.msra.mxu0 %v145
  %185 = vmatprep.subr.mxu0 0.0
  %186 = vmatpush1.msra.mxu0 %v144
  %187 = vmatprep.subr.mxu0 0.0
  %188 = vmatpush1.msra.mxu0 %v143
  %189 = vmatprep.subr.mxu0 0.0
  %190 = vmatpush1.msra.mxu0 %v142
  %191 = vmatprep.subr.mxu0 0.0
  %192 = vmatpush1.msra.mxu0 %v141
  %193 = vmatprep.subr.mxu0 0.0
  %194 = vmatpush1.msra.mxu0 %v140
  %195 = vmatprep.subr.mxu0 0.0
  %196 = vmatpush2.msra.mxu0 0.0
  %197 = vmatprep.subr.mxu0 0.0
  %198 = vmatpush2.msra.mxu0 0.0
  %199 = vmatprep.subr.mxu0 0.0
  %200 = vmatpush2.msra.mxu0 0.0
  %201 = vmatprep.subr.mxu0 0.0
  %202 = vmatpush2.msra.mxu0 0.0
  %203 = vmatprep.subr.mxu0 0.0
  %204 = vmatpush2.msra.mxu0 0.0
  %205 = vmatprep.subr.mxu0 0.0
  %206 = vmatpush2.msra.mxu0 0.0
  %207 = vmatprep.subr.mxu0 0.0
  %208 = vmatpush2.msra.mxu0 0.0
  %209 = vmatprep.subr.mxu0 0.0
  %210 = vmatpush2.msra.mxu0 0.0
  %211 = vmatprep.subr.mxu0 0.0
  %212 = vmatpush2.msra.mxu0 0.0
  %213 = vmatprep.subr.mxu0 0.0
  %214 = vmatpush2.msra.mxu0 0.0
  %215 = vmatprep.subr.mxu0 0.0
  %216 = vmatpush2.msra.mxu0 0.0
  %217 = vmatprep.subr.mxu0 0.0
  %218 = vmatpush2.msra.mxu0 0.0
  %219 = vmatprep.subr.mxu0 0.0
  %220 = vmatpush2.msra.mxu0 0.0
  %221 = vmatprep.subr.mxu0 0.0
  %222 = vmatpush2.msra.mxu0 0.0
  %223 = vmatprep.subr.mxu0 0.0
  %224 = vmatpush2.msra.mxu0 0.0
  %225 = vmatprep.subr.mxu0 0.0
  %226 = vmatpush2.msra.mxu0 0.0
  %227 = vmatprep.mubr.f32.mxu0 0.0
  %228 = vmatmul.mubr.f32.gmra.mxu0 %v138
  %v229 = vpop.f32.mrf.mxu0
  %v230 = vadd.f32 %v161, %v229
  %v231 = vpop.f32.mrf.mxu0
  %232 = vmatprep.mubr.f32.mxu0 0.0
  %233 = vmatmul.mubr.f32.gmra.mxu0 %v139
  %v234 = vpop.f32.mrf.mxu0
  %v235 = vadd.f32 %v161, %v234
  %v236 = vpop.f32.mrf.mxu0
  %237 = vdwg.mxu0
  %238 = vst [vmem:[%s5] sm:$0xff] %v230
  %239 = vst [vmem:[%s5 + $0x8] sm:$0xff] %v235
  // Predicated region
  $region22: #{side_mlp_forward.1} parent=0 // pred_check
    _
  $region23: #{side_mlp_forward.1} parent=0 // pred_check_branch
    %241 = sbr.rel (0) target = $region25
  $region24: #{side_mlp_forward.1} parent=0 // pred_region
    _
  $region25: #{side_mlp_forward.1} parent=0 // pred_fallthru
    _
  // Predicated region
  $region26: #{side_mlp_forward.1} parent=0 // pred_check
    _
  $region27: #{side_mlp_forward.1} parent=0 // pred_check_branch
    %243 = sbr.rel (0) target = $region29
  $region28: #{side_mlp_forward.1} parent=0 // pred_region
    _
  $region29: #{side_mlp_forward.1} parent=0 // pred_fallthru
    _

</llo_original>
